<compile_context>
chip_gen: v7x
topology: tpu7x:2x2x1
jax: 0.10.0
libtpu: 0.0.40
codegen_flags: <defaults>
</compile_context>

<pallas_src>
import functools

import jax
import jax.numpy as jnp
from jax.experimental import pallas as pl
from jax.experimental.pallas import tpu as pltpu


_VMEM_BUDGET_BYTES = 40 * 1024 * 1024   # leaves headroom on v7x's 64 MiB VMEM
_VMEM_LIMIT_BYTES = 48 * 1024 * 1024    # raise the scoped default (16/32 MiB)


def _pick_row_tile(N, D):
    """Largest MXU-friendly row tile of A that fits the VMEM budget.

    Budget: resident E (N*D bf16, conservatively counted double-buffered) +
    double-buffered {A row tile (tm*N bf16), acc-in tile (tm*D f32),
    e-next tile (tm*D bf16), acc-next tile (tm*D f32)}.
    """
    fixed = 2 * N * D * 2
    per_row = 2 * (N * 2 + D * 4 + D * 2 + D * 4)
    avail = max(_VMEM_BUDGET_BYTES - fixed, 0)
    tm = avail // per_row
    if tm >= N:
        return N
    if tm >= 256:
        tm = (tm // 256) * 256      # v6e/v7x MXU is 2x256^2
    else:
        tm = max(8, (tm // 8) * 8)
    return min(tm, N)


def _lightgcn_layer_kernel(a_ref, e_ref, acc_ref, e_next_ref, acc_next_ref):
    """One propagation step for a row tile: e_next = A_tile @ E ; acc += e_next."""
    prod = jnp.dot(a_ref[...], e_ref[...], preferred_element_type=jnp.float32)
    e_next_ref[...] = prod.astype(e_next_ref.dtype)
    acc_next_ref[...] = acc_ref[...] + prod


def _lightgcn_layer(a_bf, e_bf, acc, tm):
    """E^(k+1), acc^(k+1) = A @ E^(k), acc^(k) + A @ E^(k) (row-tiled SpMM)."""
    N, D = acc.shape
    num_tiles = pl.cdiv(N, tm)
    cost = pl.CostEstimate(
        flops=2 * N * N * D,
        transcendentals=0,
        bytes_accessed=N * N * 2 + N * D * 2 + N * D * 4 + N * D * 2 + N * D * 4,
    )
    e_next, acc_next = pl.pallas_call(
        _lightgcn_layer_kernel,
        out_shape=(
            jax.ShapeDtypeStruct((N, D), jnp.bfloat16),
            jax.ShapeDtypeStruct((N, D), jnp.float32),
        ),
        grid_spec=pltpu.PrefetchScalarGridSpec(
            num_scalar_prefetch=0,
            grid=(num_tiles,),
            in_specs=[
                pl.BlockSpec((tm, N), lambda i: (i, 0)),   # A row tile (streamed)
                pl.BlockSpec((N, D), lambda i: (0, 0)),    # E^(k), resident
                pl.BlockSpec((tm, D), lambda i: (i, 0)),   # layer-sum in
            ],
            out_specs=[
                pl.BlockSpec((tm, D), lambda i: (i, 0)),   # E^(k+1) tile
                pl.BlockSpec((tm, D), lambda i: (i, 0)),   # layer-sum out
            ],
        ),
        compiler_params=pltpu.CompilerParams(
            dimension_semantics=("parallel",),
            vmem_limit_bytes=_VMEM_LIMIT_BYTES,
        ),
        cost_estimate=cost,
    )(a_bf, e_bf, acc)
    return e_next, acc_next


def _gather_scale_kernel(idx_ref, ef_ref, out_ref, *, scale):
    # idx_ref (SMEM, scalar-prefetched) is consumed by the index_maps.
    del idx_ref
    out_ref[...] = ef_ref[...] * scale


def _gather_prompt_rows(acc, idx, scale):
    """out[r] = acc[idx[r]] * scale, via scalar-prefetch-driven DMA gather."""
    N, D = acc.shape
    R = idx.shape[0]
    acc3 = acc.reshape(N, 1, D)   # unit sublane dim keeps blocks layout-legal
    out = pl.pallas_call(
        functools.partial(_gather_scale_kernel, scale=scale),
        out_shape=jax.ShapeDtypeStruct((R, 1, D), jnp.float32),
        grid_spec=pltpu.PrefetchScalarGridSpec(
            num_scalar_prefetch=1,
            grid=(R,),
            in_specs=[
                pl.BlockSpec((1, 1, D), lambda r, idx_ref: (idx_ref[r], 0, 0)),
            ],
            out_specs=pl.BlockSpec((1, 1, D), lambda r, idx_ref: (r, 0, 0)),
        ),
        compiler_params=pltpu.CompilerParams(
            dimension_semantics=("arbitrary",),
            vmem_limit_bytes=_VMEM_LIMIT_BYTES,
        ),
    )(idx, acc3)
    return out.reshape(R, D)


def rec_continuous_prompt_forward(a_norm, emb0, user_id, item_ids, num_users, K=3):
    """Equivalent of RecommendationContinuousPromptModel.forward.

    a_norm  : [N, N] f32 symmetric-normalized adjacency (N = users + items)
    emb0    : [N, D] f32 layer-0 embeddings (users stacked over items)
    user_id : [B] int
    item_ids: [B, L] int
    returns : [B, 1 + L, D] f32
    """
    B = user_id.shape[0]
    L = item_ids.shape[1]
    P = 1 + L
    N, D = emb0.shape
    tm = _pick_row_tile(N, D)

    # bf16 operands for the MXU; f32 layer-sum accumulator.
    a_bf = a_norm.astype(jnp.bfloat16)
    e_bf = emb0.astype(jnp.bfloat16)
    acc = emb0.astype(jnp.float32)
    for _ in range(K):
        e_bf, acc = _lightgcn_layer(a_bf, e_bf, acc, tm)

    # Flattened row indices into the [N, D] layer-sum table: row 0 of each
    # prompt is the user, rows 1..L are the items (offset by num_users).
    idx = jnp.concatenate([user_id[:, None], item_ids + num_users], axis=1)
    idx = jnp.clip(idx.reshape(-1).astype(jnp.int32), 0, N - 1)

    out = _gather_prompt_rows(acc, idx, 1.0 / (K + 1))
    return out.reshape(B, P, D)


def _reference_forward(a_norm, emb0, user_id, item_ids, num_users, K=3):
    """Plain-JAX f32 reference mirroring the PyTorch LightGCN + gather/concat."""
    e = emb0
    acc = emb0
    for _ in range(K):
        e = a_norm @ e
        acc = acc + e
    ef = acc / (K + 1)
    users_f = ef[:num_users]
    items_f = ef[num_users:]
    return jnp.concatenate(
        [users_f[user_id][:, None, :], items_f[item_ids]], axis=1
    )


if __name__ == "__main__":
    # Small, deterministic synthetic setup (no .pt / edge_index file loading:
    # the sparse interaction graph is synthesized in-script).
    num_users = 8
    num_items = 24
    N = num_users + num_items
    D = 64          # LightGCN default embedding_dim
    K = 3           # LightGCN default number of propagation layers
    B = 2           # batch of prompts
    L = 4           # items per prompt
    num_edges = 64  # synthetic user-item interactions

    key = jax.random.PRNGKey(0)
    k_e1, k_e2, k_emb, k_u, k_i = jax.random.split(key, 5)

    # Synthetic bipartite interaction edges -> dense symmetric adjacency.
    rows_u = jax.random.randint(k_e1, (num_edges,), 0, num_users)
    cols_i = jax.random.randint(k_e2, (num_edges,), 0, num_items)
    A = jnp.zeros((N, N), dtype=jnp.float32)
    A = A.at[rows_u, cols_i + num_users].set(1.0)
    A = A.at[cols_i + num_users, rows_u].set(1.0)

    # gcn_norm (symmetric, no self-loops — LightGCN default).
    deg = A.sum(axis=1)
    d_inv_sqrt = jnp.where(deg > 0, 1.0 / jnp.sqrt(jnp.maximum(deg, 1e-12)), 0.0)
    a_norm = d_inv_sqrt[:, None] * A * d_inv_sqrt[None, :]

    # nn.init.normal_(std=0.1) for user and item embeddings, stacked as E^(0).
    emb0 = 0.1 * jax.random.normal(k_emb, (N, D), dtype=jnp.float32)

    user_id = jax.random.randint(k_u, (B,), 0, num_users)
    item_ids = jax.random.randint(k_i, (B, L), 0, num_items)

    out = rec_continuous_prompt_forward(a_norm, emb0, user_id, item_ids, num_users, K=K)
    out = jax.block_until_ready(out)

    ref = _reference_forward(a_norm, emb0, user_id, item_ids, num_users, K=K)

    assert out.shape == (B, 1 + L, D), out.shape
    # bf16 MXU operands with f32 accumulation: loosen tolerance vs f32 reference.
    assert jnp.allclose(out, ref, atol=1e-2, rtol=1e-2), "mismatch vs reference"
    print("KERNEL_OK")
</pallas_src>

<mosaic_0001>
module attributes {stable_mosaic.version = 11 : i64} {
  func.func @_lightgcn_layer_kernel(%arg0: i32, %arg1: memref<32x32xbf16, #tpu.memory_space<vmem>>, %arg2: memref<32x64xbf16, #tpu.memory_space<vmem>>, %arg3: memref<32x64xf32, #tpu.memory_space<vmem>>, %arg4: memref<32x64xbf16, #tpu.memory_space<vmem>>, %arg5: memref<32x64xf32, #tpu.memory_space<vmem>>) attributes {dimension_semantics = [#tpu.dimension_semantics<parallel>], iteration_bounds = array<i64: 1>, scalar_prefetch = 0 : i64, scratch_operands = 0 : i64, tpu.core_type = #tpu.core_type<tc>, window_params = [{transform_indices = @transform_0, window_bounds = array<i64: 32, 32>}, {pipeline_mode = #tpu.pipeline_mode<synchronous>, transform_indices = @transform_1, window_bounds = array<i64: 32, 64>}, {transform_indices = @transform_2, window_bounds = array<i64: 32, 64>}, {transform_indices = @transform_3, window_bounds = array<i64: 32, 64>}, {transform_indices = @transform_4, window_bounds = array<i64: 32, 64>}]} {
    %c0 = arith.constant 0 : index
    %c0_0 = arith.constant 0 : index
    %0 = vector.load %arg1[%c0, %c0_0] : memref<32x32xbf16, #tpu.memory_space<vmem>>, vector<32x32xbf16>
    %c0_1 = arith.constant 0 : index
    %c0_2 = arith.constant 0 : index
    %1 = vector.load %arg2[%c0_1, %c0_2] : memref<32x64xbf16, #tpu.memory_space<vmem>>, vector<32x64xbf16>
    %cst = arith.constant dense<0.000000e+00> : vector<32x64xf32>
    %2 = tpu.matmul %0, %1, %cst {dimension_numbers = #tpu.dot_dimension_numbers<[1], [0], [0], [1], [0, 0, 1, 1], [], []>} : vector<32x32xbf16>, vector<32x64xbf16>, vector<32x64xf32> -> vector<32x64xf32>
    %3 = arith.truncf %2 : vector<32x64xf32> to vector<32x64xbf16>
    %c0_3 = arith.constant 0 : index
    %c0_4 = arith.constant 0 : index
    %4 = vector.load %arg4[%c0_3, %c0_4] : memref<32x64xbf16, #tpu.memory_space<vmem>>, vector<32x64xbf16>
    tpu.vector_store %arg4[%c0_3, %c0_4], %3 {strides = array<i32>} : memref<32x64xbf16, #tpu.memory_space<vmem>>, vector<32x64xbf16>,
    %c0_5 = arith.constant 0 : index
    %c0_6 = arith.constant 0 : index
    %5 = vector.load %arg3[%c0_5, %c0_6] : memref<32x64xf32, #tpu.memory_space<vmem>>, vector<32x64xf32>
    %6 = arith.addf %5, %2 : vector<32x64xf32>
    %c0_7 = arith.constant 0 : index
    %c0_8 = arith.constant 0 : index
    %7 = vector.load %arg5[%c0_7, %c0_8] : memref<32x64xf32, #tpu.memory_space<vmem>>, vector<32x64xf32>
    tpu.vector_store %arg5[%c0_7, %c0_8], %6 {strides = array<i32>} : memref<32x64xf32, #tpu.memory_space<vmem>>, vector<32x64xf32>,
    return
  }
  func.func @transform_0(%arg0: i32) -> (i32, i32) {
    %c0_i32 = arith.constant 0 : i32
    %c0_i32_0 = arith.constant 0 : i32
    return %arg0, %c0_i32 : i32, i32
  }
  func.func @transform_1(%arg0: i32) -> (i32, i32) {
    %c0_i32 = arith.constant 0 : i32
    %c0_i32_0 = arith.constant 0 : i32
    %c0_i32_1 = arith.constant 0 : i32
    return %c0_i32, %c0_i32_0 : i32, i32
  }
  func.func @transform_2(%arg0: i32) -> (i32, i32) {
    %c0_i32 = arith.constant 0 : i32
    %c0_i32_0 = arith.constant 0 : i32
    return %arg0, %c0_i32 : i32, i32
  }
  func.func @transform_3(%arg0: i32) -> (i32, i32) {
    %c0_i32 = arith.constant 0 : i32
    %c0_i32_0 = arith.constant 0 : i32
    return %arg0, %c0_i32 : i32, i32
  }
  func.func @transform_4(%arg0: i32) -> (i32, i32) {
    %c0_i32 = arith.constant 0 : i32
    %c0_i32_0 = arith.constant 0 : i32
    return %arg0, %c0_i32 : i32, i32
  }
}

</mosaic_0001>

<llo_original>
// kernel: tpu_custom_call.1
$region0: #{tpu_custom_call.1}
  #allocation0 [shape = 'u32[]', space=smem, size = 0x4, offset = 0x4, fixed_abs, tag = 'smem constant byte address 0x4 - core index']
  #allocation1 [shape = 'u32[144,128]{1,0:T(1,128)}', space=vmem, size = 0x12000, scoped, tag = 'internal scratch']
  %s0 = inlined_call_operand.hbm [shape: bf16[32,32], index: 0, kind: input, shape index: {}]
  %s1 = inlined_call_operand.hbm [shape: bf16[32,64], index: 1, kind: input, shape index: {}]
  %s2 = inlined_call_operand.hbm [shape: f32[32,64], index: 2, kind: input, shape index: {}]
  %s3 = inlined_call_operand.hbm [shape: bf16[32,64], index: 3, kind: output, shape index: {0}]
  %s4 = inlined_call_operand.hbm [shape: f32[32,64], index: 4, kind: output, shape index: {1}]
  %5 = xla_tuple %s3, %s4
  %s6 = sld [smem:[#allocation0]]
  $region42: #{tpu_custom_call.1} parent=0
    _
  %s8 = ssub.s32 1, %s6
  %s9 = scalar_select 0, %s8, %s6
  $region1: #{tpu_custom_call.1} parent=0
    #allocation2 [shape = 'u8[8192]{0}', space=vmem, size = 0x2000, scoped, tag = 'input window, operand 0, single buffered']
    #allocation3 [shape = 's32[1]{0}', space=sflag, size = 0x4, scoped, tag = 'scoped memory for tpu_custom_call.1']
    #allocation4 [shape = 's32[1]{0}', space=sflag, size = 0x4, scoped, tag = 'scoped memory for tpu_custom_call.1']
    #allocation5 [shape = 'u8[8192]{0}', space=vmem, size = 0x2000, scoped, tag = 'input window, operand 1, single buffered']
    #allocation6 [shape = 's32[1]{0}', space=sflag, size = 0x4, scoped, tag = 'scoped memory for tpu_custom_call.1']
    #allocation7 [shape = 'u8[16384]{0}', space=vmem, size = 0x4000, scoped, tag = 'input window, operand 2, single buffered']
    #allocation8 [shape = 'u8[8192]{0}', space=vmem, size = 0x2000, scoped, tag = 'output window, operand 0, single buffered']
    #allocation9 [shape = 'u8[16384]{0}', space=vmem, size = 0x4000, scoped, tag = 'output window, operand 1, single buffered']
    #allocation10 [shape = 's32[1]{0}', space=sflag, size = 0x4, scoped, tag = 'scoped memory for tpu_custom_call.1']
    %10 = vsyncpa [#allocation3], 0
    %11 = vsyncpa [#allocation6], 0
    %12 = vsyncpa [#allocation4], 0
    %13 = vsyncpa [#allocation10], 0
    // Predicated region
    $region2: #{tpu_custom_call.1} parent=1 // pred_check
      _
    $region3: #{tpu_custom_call.1} parent=1 // pred_check_branch
      %15 = sbr.rel (0) target = $region5
    $region4: #{tpu_custom_call.1} parent=1 // pred_region
      %s17 = ssub.s32 256, 256
      %18 = vsyncadd [#allocation3], %s17
      %s19 = sshll.u32 [#allocation2], 4
      %s20 = int_to_ptr.vmem [resolvable:$true] %s19
      %25 = dma.hbm_to_vmem [thread:$0]  %s0, 256, %s20, [#allocation3], 64, 64, 4
    $region5: #{tpu_custom_call.1} parent=1 // pred_fallthru
      _
    // Predicated region
    $region6: #{tpu_custom_call.1} parent=1 // pred_check
      _
    $region7: #{tpu_custom_call.1} parent=1 // pred_check_branch
      %27 = sbr.rel (0) target = $region9
    $region8: #{tpu_custom_call.1} parent=1 // pred_region
      %s29 = ssub.s32 256, 256
      %30 = vsyncadd [#allocation6], %s29
      %s31 = sshll.u32 [#allocation5], 4
      %s32 = int_to_ptr.vmem [resolvable:$true] %s31
      %37 = dma.hbm_to_vmem [thread:$0]  %s1, 256, %s32, [#allocation6], 64, 64, 4
    $region9: #{tpu_custom_call.1} parent=1 // pred_fallthru
      _
    // Predicated region
    $region10: #{tpu_custom_call.1} parent=1 // pred_check
      _
    $region11: #{tpu_custom_call.1} parent=1 // pred_check_branch
      %39 = sbr.rel (0) target = $region13
    $region12: #{tpu_custom_call.1} parent=1 // pred_region
      %s41 = ssub.s32 512, 512
      %42 = vsyncadd [#allocation6], %s41
      %s43 = sshll.u32 [#allocation7], 4
      %s44 = int_to_ptr.vmem [resolvable:$true] %s43
      %49 = dma.hbm_to_vmem [thread:$0]  %s2, 512, %s44, [#allocation6], 128, 128, 8
    $region13: #{tpu_custom_call.1} parent=1 // pred_fallthru
      _
    // Predicated region
    $region14: #{tpu_custom_call.1} parent=1 // pred_check
      _
    $region15: #{tpu_custom_call.1} parent=1 // pred_check_branch
      %51 = sbr.rel (0) target = $region17
    $region16: #{tpu_custom_call.1} parent=1 // pred_region
      %52 = dma.done [#allocation3], 256
    $region17: #{tpu_custom_call.1} parent=1 // pred_fallthru
      _
    // Predicated region
    $region18: #{tpu_custom_call.1} parent=1 // pred_check
      _
    $region19: #{tpu_custom_call.1} parent=1 // pred_check_branch
      %54 = sbr.rel (0) target = $region21
    $region20: #{tpu_custom_call.1} parent=1 // pred_region
      %55 = dma.done [#allocation6], 256
    $region21: #{tpu_custom_call.1} parent=1 // pred_fallthru
      _
    // Predicated region
    $region22: #{tpu_custom_call.1} parent=1 // pred_check
      _
    $region23: #{tpu_custom_call.1} parent=1 // pred_check_branch
      %57 = sbr.rel (0) target = $region25
    $region24: #{tpu_custom_call.1} parent=1 // pred_region
      %58 = dma.done [#allocation6], 512
    $region25: #{tpu_custom_call.1} parent=1 // pred_fallthru
      _
    %v60 = vld [vmem:[#allocation2] sm:$0xf]
    %v61 = vld [vmem:[#allocation2 + $0x4] sm:$0xf]
    %v62 = vld [vmem:[#allocation2 + $0x8] sm:$0xf]
    %v63 = vld [vmem:[#allocation2 + $0xc] sm:$0xf]
    %v64 = vld [vmem:[#allocation5] sm:$0xf]
    %v65 = vld [vmem:[#allocation5 + $0x4] sm:$0xf]
    %v66 = vld [vmem:[#allocation5 + $0x8] sm:$0xf]
    %v67 = vld [vmem:[#allocation5 + $0xc] sm:$0xf]
    %v72 = vunpack.c.l.b16 %v60
    %v73 = vunpack.c.l.b16 %v61
    %v74 = vunpack.c.l.b16 %v62
    %v75 = vunpack.c.l.b16 %v63
    %v76 = vpack.c.b16 %v73, %v72
    %v77 = vpack.c.b16 %v75, %v74
    %v82 = vunpack.c.l.b16 %v64
    %v83 = vunpack.c.l.b16 %v65
    %v84 = vunpack.c.l.b16 %v66
    %v85 = vunpack.c.l.b16 %v67
    %v86 = vpack.c.b16 %v83, %v82
    %v87 = vpack.c.b16 %v85, %v84
    %vm90 = vcmask 261120
    %v92 = vsel %vm90, %v76, 0
    %v95 = vsel %vm90, %v77, 0
    %97 = vmatprep.subr.bf16.mxu0 0
    %98 = vmatpush1.bf16.msra.mxu0 %v86
    %99 = vmatprep.subr.bf16.mxu0 0
    %100 = vmatpush1.bf16.msra.mxu0 %v87
    %101 = vmatprep.subr.bf16.mxu0 0
    %102 = vmatpush1.bf16.msra.mxu0 0
    %103 = vmatprep.subr.bf16.mxu0 0
    %104 = vmatpush1.bf16.msra.mxu0 0
    %105 = vmatprep.subr.bf16.mxu0 0
    %106 = vmatpush1.bf16.msra.mxu0 0
    %107 = vmatprep.subr.bf16.mxu0 0
    %108 = vmatpush1.bf16.msra.mxu0 0
    %109 = vmatprep.subr.bf16.mxu0 0
    %110 = vmatpush1.bf16.msra.mxu0 0
    %111 = vmatprep.subr.bf16.mxu0 0
    %112 = vmatpush1.bf16.msra.mxu0 0
    %113 = vmatprep.subr.bf16.mxu0 0
    %114 = vmatpush1.bf16.msra.mxu0 0
    %115 = vmatprep.subr.bf16.mxu0 0
    %116 = vmatpush1.bf16.msra.mxu0 0
    %117 = vmatprep.subr.bf16.mxu0 0
    %118 = vmatpush1.bf16.msra.mxu0 0
    %119 = vmatprep.subr.bf16.mxu0 0
    %120 = vmatpush1.bf16.msra.mxu0 0
    %121 = vmatprep.subr.bf16.mxu0 0
    %122 = vmatpush1.bf16.msra.mxu0 0
    %123 = vmatprep.subr.bf16.mxu0 0
    %124 = vmatpush1.bf16.msra.mxu0 0
    %125 = vmatprep.subr.bf16.mxu0 0
    %126 = vmatpush1.bf16.msra.mxu0 0
    %127 = vmatprep.subr.bf16.mxu0 0
    %128 = vmatpush1.bf16.msra.mxu0 0
    %129 = vmatprep.mubr.bf16.mxu0 0
    %130 = vmatmul.mubr.bf16.gmra.mrb[0].mxu0 %v92
    %v131 = vpop.f32.mrb[0].mxu0
    %v132 = vadd.f32 0.0, %v131
    %v133 = vpop.f32.mrb[0].mxu0
    %v134 = vpop.f32.mrb[0].mxu0
    %v135 = vadd.f32 0.0, %v134
    %v136 = vpop.f32.mrb[0].mxu0
    %137 = vmatprep.mubr.bf16.mxu0 0
    %138 = vmatmul.mubr.bf16.gmra.mrb[0].mxu0 %v95
    %v139 = vpop.f32.mrb[0].mxu0
    %v140 = vadd.f32 0.0, %v139
    %v141 = vpop.f32.mrb[0].mxu0
    %v142 = vpop.f32.mrb[0].mxu0
    %v143 = vadd.f32 0.0, %v142
    %v144 = vpop.f32.mrb[0].mxu0
    %145 = vdwg.mxu0
    %v146 = vpack.c.bf16 %v135, %v132
    %v147 = vpack.c.bf16 %v143, %v140
    %v150 = vunpack.c.l.b16 %v146
    %v151 = vunpack.c.h.b16 %v146
    %v152 = vunpack.c.l.b16 %v147
    %v153 = vunpack.c.h.b16 %v147
    %v154 = vpack.c.b16 %v150, %v150
    %v155 = vpack.c.b16 %v151, %v151
    %v156 = vpack.c.b16 %v152, %v152
    %v157 = vpack.c.b16 %v153, %v153
    %vm162 = vcmask 519168
    %163 = vst.msk [vmem:[#allocation8] sm:$0xf] %vm162, %v154
    %164 = vst.msk [vmem:[#allocation8 + $0x4] sm:$0xf] %vm162, %v155
    %165 = vst.msk [vmem:[#allocation8 + $0x8] sm:$0xf] %vm162, %v156
    %166 = vst.msk [vmem:[#allocation8 + $0xc] sm:$0xf] %vm162, %v157
    %v167 = vld [vmem:[#allocation7] sm:$0xff]
    %v168 = vld [vmem:[#allocation7 + $0x8] sm:$0xff]
    %v169 = vld [vmem:[#allocation7 + $0x10] sm:$0xff]
    %v170 = vld [vmem:[#allocation7 + $0x18] sm:$0xff]
    %v171 = vadd.f32 %v167, %v132
    %v172 = vadd.f32 %v168, %v135
    %v173 = vadd.f32 %v169, %v140
    %v174 = vadd.f32 %v170, %v143
    %vm175 = vcmask 523264
    %176 = vst.msk [vmem:[#allocation9] sm:$0xff] %vm175, %v171
    %177 = vst.msk [vmem:[#allocation9 + $0x8] sm:$0xff] %vm175, %v172
    %178 = vst.msk [vmem:[#allocation9 + $0x10] sm:$0xff] %vm175, %v173
    %179 = vst.msk [vmem:[#allocation9 + $0x18] sm:$0xff] %vm175, %v174
    // Predicated region
    $region26: #{tpu_custom_call.1} parent=1 // pred_check
      _
    $region27: #{tpu_custom_call.1} parent=1 // pred_check_branch
      %181 = sbr.rel (0) target = $region29
    $region28: #{tpu_custom_call.1} parent=1 // pred_region
      %s183 = ssub.s32 256, 256
      %184 = vsyncadd [#allocation4], %s183
      %s185 = sshll.u32 [#allocation8], 4
      %s186 = int_to_ptr.vmem [resolvable:$true] %s185
      %191 = dma.vmem_to_hbm [thread:$0]  %s186, 256, %s3, [#allocation4], 64, 64, 4
    $region29: #{tpu_custom_call.1} parent=1 // pred_fallthru
      _
    // Predicated region
    $region30: #{tpu_custom_call.1} parent=1 // pred_check
      _
    $region31: #{tpu_custom_call.1} parent=1 // pred_check_branch
      %193 = sbr.rel (0) target = $region33
    $region32: #{tpu_custom_call.1} parent=1 // pred_region
      %s195 = ssub.s32 512, 512
      %196 = vsyncadd [#allocation10], %s195
      %s197 = sshll.u32 [#allocation9], 4
      %s198 = int_to_ptr.vmem [resolvable:$true] %s197
      %203 = dma.vmem_to_hbm [thread:$0]  %s198, 512, %s4, [#allocation10], 128, 128, 8
    $region33: #{tpu_custom_call.1} parent=1 // pred_fallthru
      _
    // Predicated region
    $region34: #{tpu_custom_call.1} parent=1 // pred_check
      _
    $region35: #{tpu_custom_call.1} parent=1 // pred_check_branch
      %205 = sbr.rel (0) target = $region37
    $region36: #{tpu_custom_call.1} parent=1 // pred_region
      %206 = dma.done [#allocation4], 256
    $region37: #{tpu_custom_call.1} parent=1 // pred_fallthru
      _
    // Predicated region
    $region38: #{tpu_custom_call.1} parent=1 // pred_check
      _
    $region39: #{tpu_custom_call.1} parent=1 // pred_check_branch
      %208 = sbr.rel (0) target = $region41
    $region40: #{tpu_custom_call.1} parent=1 // pred_region
      %209 = dma.done [#allocation10], 512
    $region41: #{tpu_custom_call.1} parent=1 // pred_fallthru
      _
    %210 = vsyncpa [#allocation3], 1
    %211 = vsyncpa [#allocation6], 1
    %212 = vsyncpa [#allocation4], 1
    %213 = vsyncpa [#allocation10], 1

</llo_original>
